<compile_context>
chip_gen: v6e
topology: v6e:2x2x1
jax: 0.10.0
libtpu: 0.0.40
codegen_flags: <defaults>
</compile_context>

<pallas_src>
import jax
import jax.numpy as jnp
from jax.experimental import pallas as pl
from jax.experimental.pallas import tpu as pltpu

_VMEM = pl.BlockSpec(memory_space=pltpu.MemorySpace.VMEM)


# ---------------------------------------------------------------------------
# Kernel 1: single GRU step + Linear + ReLU (the module's forward, exactly).
# ---------------------------------------------------------------------------
def _step_kernel(xh_ref, h_ref, w_cat_ref, b_rz_ref, b_in_ref, b_hn_ref,
                 w_lin_ref, b_lin_ref, o_ref, h_out_ref):
    H = h_ref.shape[-1]
    h = h_ref[...]                                              # f32 state

    # One fused MXU matmul: (B, in+H) @ (in+H, 4H) -> (B, 4H), f32 accumulate.
    g = jnp.dot(xh_ref[...], w_cat_ref[...],
                preferred_element_type=jnp.float32)

    rz = jax.nn.sigmoid(g[:, : 2 * H] + b_rz_ref[...])          # r|z share one EUP pass
    r = rz[:, :H]
    z = rz[:, H:]
    n = jnp.tanh(g[:, 2 * H: 3 * H] + b_in_ref[...]
                 + r * (g[:, 3 * H:] + b_hn_ref[...]))
    h_new = (1.0 - z) * n + z * h                               # all-f32 update

    logits = jnp.dot(h_new.astype(w_lin_ref.dtype), w_lin_ref[...],
                     preferred_element_type=jnp.float32) + b_lin_ref[...]
    o_ref[...] = jnp.maximum(logits, 0.0).astype(o_ref.dtype)
    h_out_ref[...] = h_new.astype(h_out_ref.dtype)


# ---------------------------------------------------------------------------
# Kernel 2a: batched input projection for all T steps (off the serial path).
# ---------------------------------------------------------------------------
def _inproj_kernel(x_ref, w_ih_ref, gx_ref):
    gx_ref[...] = jnp.dot(x_ref[...], w_ih_ref[...],
                          preferred_element_type=jnp.float32)


# ---------------------------------------------------------------------------
# Kernel 2b: T chained steps; grid over time, hidden carried in VMEM scratch.
# ---------------------------------------------------------------------------
def _seq_kernel(gx_ref, h0_ref, w_hh_ref, b_rz_ref, b_in_ref, b_hn_ref,
                w_lin_ref, b_lin_ref, o_ref, h_final_ref, h_scratch):
    t = pl.program_id(0)

    @pl.when(t == 0)
    def _():
        h_scratch[...] = h0_ref[...]

    H = h_scratch.shape[-1]
    h = h_scratch[...]
    gx = gx_ref[0]                                              # (B, 3H) precomputed

    gh = jnp.dot(h.astype(w_hh_ref.dtype), w_hh_ref[...],
                 preferred_element_type=jnp.float32)

    rz = jax.nn.sigmoid(gx[:, : 2 * H] + gh[:, : 2 * H] + b_rz_ref[...])
    r = rz[:, :H]
    z = rz[:, H:]
    n = jnp.tanh(gx[:, 2 * H:] + b_in_ref[...]
                 + r * (gh[:, 2 * H:] + b_hn_ref[...]))
    h_new = (1.0 - z) * n + z * h

    logits = jnp.dot(h_new.astype(w_lin_ref.dtype), w_lin_ref[...],
                     preferred_element_type=jnp.float32) + b_lin_ref[...]
    o_ref[0] = jnp.maximum(logits, 0.0).astype(o_ref.dtype)
    h_scratch[...] = h_new

    @pl.when(t == pl.num_programs(0) - 1)
    def _():
        h_final_ref[...] = h_new.astype(h_final_ref.dtype)


# ---------------------------------------------------------------------------
# Wrappers
# ---------------------------------------------------------------------------
def prediction_encoder_forward(x, hidden, params, compute_dtype=jnp.float32):
    """Single GRU step + Linear + ReLU. x: (B, in_dim); hidden: (1, B, H)."""
    B, _ = x.shape
    H = params["w_hh_t"].shape[0]
    out_dim = params["w_lin_t"].shape[-1]
    h = hidden.reshape(B, H)
    xh = jnp.concatenate([x, h], axis=-1).astype(compute_dtype)  # (B, in+H)

    o, h_new = pl.pallas_call(
        _step_kernel,
        out_shape=(
            jax.ShapeDtypeStruct((B, out_dim), jnp.float32),
            jax.ShapeDtypeStruct((B, H), jnp.float32),
        ),
        in_specs=[_VMEM] * 8,
        out_specs=(_VMEM, _VMEM),
        input_output_aliases={1: 1},       # recurrent state updated in place
    )(
        xh,
        h,
        params["w_cat"].astype(compute_dtype),
        params["b_rz"],
        params["b_in"],
        params["b_hn"],
        params["w_lin_t"].astype(compute_dtype),
        params["b_lin"],
    )
    return o, h_new.reshape(1, B, H)


def prediction_encoder_forward_seq(xs, hidden, params, compute_dtype=jnp.float32):
    """T chained steps. xs: (T, B, in_dim); hidden: (1, B, H).

    Returns (outputs (T, B, out_dim), final hidden (1, B, H)), equivalent to
    calling the module's forward T times with the hidden state threaded through.
    """
    T, B, in_dim = xs.shape
    H = params["w_hh_t"].shape[0]
    out_dim = params["w_lin_t"].shape[-1]
    h0 = hidden.reshape(B, H)

    # Phase 1: hoist the input projection out of the serial recurrence.
    # TODO(synk): tile this matmul over rows if T*B grows beyond a few thousand.
    gx = pl.pallas_call(
        _inproj_kernel,
        out_shape=jax.ShapeDtypeStruct((T * B, 3 * H), jnp.float32),
        in_specs=[_VMEM, _VMEM],
        out_specs=_VMEM,
    )(xs.reshape(T * B, in_dim).astype(compute_dtype),
      params["w_ih_t"].astype(compute_dtype)).reshape(T, B, 3 * H)

    const = lambda t: (0, 0)  # weights / biases / state: resident across the grid
    grid_spec = pltpu.PrefetchScalarGridSpec(
        num_scalar_prefetch=0,
        grid=(T,),
        in_specs=[
            pl.BlockSpec((1, B, 3 * H), lambda t: (t, 0, 0)),   # gx_t
            pl.BlockSpec((B, H), const),                        # h0
            pl.BlockSpec((H, 3 * H), const),                    # W_hh
            pl.BlockSpec((1, 2 * H), const),                    # b_rz
            pl.BlockSpec((1, H), const),                        # b_in
            pl.BlockSpec((1, H), const),                        # b_hn
            pl.BlockSpec((H, out_dim), const),                  # W_lin
            pl.BlockSpec((1, out_dim), const),                  # b_lin
        ],
        out_specs=(
            pl.BlockSpec((1, B, out_dim), lambda t: (t, 0, 0)),  # o_t
            pl.BlockSpec((B, H), const),                         # final hidden
        ),
        scratch_shapes=[pltpu.VMEM((B, H), jnp.float32)],        # carried state
    )

    os_, h_final = pl.pallas_call(
        _seq_kernel,
        out_shape=(
            jax.ShapeDtypeStruct((T, B, out_dim), jnp.float32),
            jax.ShapeDtypeStruct((B, H), jnp.float32),
        ),
        grid_spec=grid_spec,
        compiler_params=pltpu.CompilerParams(dimension_semantics=("arbitrary",)),
    )(
        gx,
        h0,
        params["w_hh_t"].astype(compute_dtype),
        params["b_rz"],
        params["b_in"],
        params["b_hn"],
        params["w_lin_t"].astype(compute_dtype),
        params["b_lin"],
    )
    return os_, h_final.reshape(1, B, H)


# ---------------------------------------------------------------------------
# Parameter construction: PyTorch layouts -> fused kernel layouts
# ---------------------------------------------------------------------------
def make_params(w_ih, w_hh, b_ih, b_hh, w_lin, b_lin):
    """w_ih (3H,in), w_hh (3H,H), b_ih (3H,), b_hh (3H,), w_lin (out,H), b_lin (out,)."""
    H = w_hh.shape[1]
    in_dim = w_ih.shape[1]
    out_dim = w_lin.shape[0]
    w_ih_t = w_ih.T                                   # (in_dim, 3H), cols [r|z|n]
    w_hh_t = w_hh.T                                   # (H, 3H)

    # Fused single-step weight:  [x | h] @ w_cat -> (B, 4H)
    #   cols [0,2H)   r/z contributions from both x and h (sum is exact for r,z)
    #   cols [2H,3H)  x-only n contribution  (W_in)
    #   cols [3H,4H)  h-only n contribution  (W_hn, kept separate for r*(...))
    w_cat = jnp.zeros((in_dim + H, 4 * H), jnp.float32)
    w_cat = w_cat.at[:in_dim, : 2 * H].set(w_ih_t[:, : 2 * H])
    w_cat = w_cat.at[in_dim:, : 2 * H].set(w_hh_t[:, : 2 * H])
    w_cat = w_cat.at[:in_dim, 2 * H: 3 * H].set(w_ih_t[:, 2 * H:])
    w_cat = w_cat.at[in_dim:, 3 * H:].set(w_hh_t[:, 2 * H:])

    return {
        "w_ih_t": w_ih_t,
        "w_hh_t": w_hh_t,
        "w_cat": w_cat,
        "b_rz": (b_ih[: 2 * H] + b_hh[: 2 * H]).reshape(1, 2 * H),
        "b_in": b_ih[2 * H:].reshape(1, H),
        "b_hn": b_hh[2 * H:].reshape(1, H),
        "w_lin_t": w_lin.T,                           # (H, out_dim)
        "b_lin": b_lin.reshape(1, out_dim),
    }


# ---------------------------------------------------------------------------
# Pure-JAX reference, computed directly from the raw PyTorch-layout weights
# ---------------------------------------------------------------------------
def _reference_step(x, h, w_ih, w_hh, b_ih, b_hh, w_lin, b_lin):
    H = h.shape[-1]
    gi = x @ w_ih.T + b_ih
    gh = h @ w_hh.T + b_hh
    r = jax.nn.sigmoid(gi[:, :H] + gh[:, :H])
    z = jax.nn.sigmoid(gi[:, H: 2 * H] + gh[:, H: 2 * H])
    n = jnp.tanh(gi[:, 2 * H:] + r * gh[:, 2 * H:])
    h_new = (1.0 - z) * n + z * h
    o = jnp.maximum(h_new @ w_lin.T + b_lin, 0.0)
    return o, h_new


if __name__ == "__main__":
    B, in_dim, hidden_dim, out_dim, T = 8, 32, 32, 16, 8

    keys = jax.random.split(jax.random.PRNGKey(0), 9)
    x = jax.random.normal(keys[0], (B, in_dim), jnp.float32)
    hidden = jax.random.normal(keys[1], (1, B, hidden_dim), jnp.float32)
    xs = jax.random.normal(keys[2], (T, B, in_dim), jnp.float32)

    # Raw PyTorch-layout weights (GRU + Linear).
    w_ih = jax.random.normal(keys[3], (3 * hidden_dim, in_dim), jnp.float32) * 0.1
    w_hh = jax.random.normal(keys[4], (3 * hidden_dim, hidden_dim), jnp.float32) * 0.1
    b_ih = jax.random.normal(keys[5], (3 * hidden_dim,), jnp.float32) * 0.1
    b_hh = jax.random.normal(keys[6], (3 * hidden_dim,), jnp.float32) * 0.1
    w_lin = jax.random.normal(keys[7], (out_dim, hidden_dim), jnp.float32) * 0.1
    b_lin = jax.random.normal(keys[8], (out_dim,), jnp.float32) * 0.1

    params = make_params(w_ih, w_hh, b_ih, b_hh, w_lin, b_lin)

    # References (single step + T-step scan) from the raw weights.
    o_ref, h_ref = _reference_step(x, hidden.reshape(B, hidden_dim),
                                   w_ih, w_hh, b_ih, b_hh, w_lin, b_lin)

    def scan_body(h, x_t):
        o_t, h_new = _reference_step(x_t, h, w_ih, w_hh, b_ih, b_hh, w_lin, b_lin)
        return h_new, o_t

    h_seq_ref, os_ref = jax.lax.scan(scan_body, hidden.reshape(B, hidden_dim), xs)

    step_fn = jax.jit(prediction_encoder_forward, static_argnames=("compute_dtype",))
    seq_fn = jax.jit(prediction_encoder_forward_seq, static_argnames=("compute_dtype",))

    # f32 single step (the PyTorch module's forward).
    o, h_new = step_fn(x, hidden, params)
    # f32 multi-step (hoisted input projection + time loop inside one kernel).
    os_, h_seq = seq_fn(xs, hidden, params)
    jax.block_until_ready((o, h_new, os_, h_seq))

    assert o.shape == (B, out_dim) and h_new.shape == (1, B, hidden_dim)
    assert os_.shape == (T, B, out_dim) and h_seq.shape == (1, B, hidden_dim)
    assert jnp.allclose(o, o_ref, atol=1e-4, rtol=1e-4)
    assert jnp.allclose(h_new.reshape(B, hidden_dim), h_ref, atol=1e-4, rtol=1e-4)
    assert jnp.allclose(os_, os_ref, atol=1e-4, rtol=1e-4)
    assert jnp.allclose(h_seq.reshape(B, hidden_dim), h_seq_ref, atol=1e-4, rtol=1e-4)

    # bf16 MXU-operand path (v6e/v7x): f32 accumulation + f32 elementwise math.
    o_bf, h_bf = step_fn(x, hidden, params, compute_dtype=jnp.bfloat16)
    jax.block_until_ready((o_bf, h_bf))
    assert jnp.allclose(o_bf, o_ref, atol=5e-2, rtol=5e-2)
    assert jnp.allclose(h_bf.reshape(B, hidden_dim), h_ref, atol=5e-2, rtol=5e-2)

    print("KERNEL_OK")
</pallas_src>

<mosaic_0001>
module attributes {stable_mosaic.version = 11 : i64} {
  func.func @_step_kernel(%arg0: memref<8x64xf32, #tpu.memory_space<vmem>>, %arg1: memref<8x32xf32, #tpu.memory_space<vmem>>, %arg2: memref<64x128xf32, #tpu.memory_space<vmem>>, %arg3: memref<1x64xf32, #tpu.memory_space<vmem>>, %arg4: memref<1x32xf32, #tpu.memory_space<vmem>>, %arg5: memref<1x32xf32, #tpu.memory_space<vmem>>, %arg6: memref<32x16xf32, #tpu.memory_space<vmem>>, %arg7: memref<1x16xf32, #tpu.memory_space<vmem>>, %arg8: memref<8x16xf32, #tpu.memory_space<vmem>>, %arg9: memref<8x32xf32, #tpu.memory_space<vmem>>) attributes {dimension_semantics = [], scalar_prefetch = 0 : i64, scratch_operands = 0 : i64, tpu.core_type = #tpu.core_type<tc>} {
    %c0 = arith.constant 0 : index
    %c0_0 = arith.constant 0 : index
    %0 = vector.load %arg1[%c0, %c0_0] : memref<8x32xf32, #tpu.memory_space<vmem>>, vector<8x32xf32>
    %c0_1 = arith.constant 0 : index
    %c0_2 = arith.constant 0 : index
    %1 = vector.load %arg0[%c0_1, %c0_2] : memref<8x64xf32, #tpu.memory_space<vmem>>, vector<8x64xf32>
    %c0_3 = arith.constant 0 : index
    %c0_4 = arith.constant 0 : index
    %2 = vector.load %arg2[%c0_3, %c0_4] : memref<64x128xf32, #tpu.memory_space<vmem>>, vector<64x128xf32>
    %cst = arith.constant dense<0.000000e+00> : vector<8x128xf32>
    %3 = tpu.matmul %1, %2, %cst {dimension_numbers = #tpu.dot_dimension_numbers<[1], [0], [0], [1], [0, 0, 1, 1], [], []>} : vector<8x64xf32>, vector<64x128xf32>, vector<8x128xf32> -> vector<8x128xf32>
    %4 = vector.extract_strided_slice %3 {offsets = [0, 0], sizes = [8, 64], strides = [1, 1]} : vector<8x128xf32> to vector<8x64xf32>
    %c0_5 = arith.constant 0 : index
    %c0_6 = arith.constant 0 : index
    %5 = vector.load %arg3[%c0_5, %c0_6] : memref<1x64xf32, #tpu.memory_space<vmem>>, vector<1x64xf32>
    %6 = vector.broadcast %5 : vector<1x64xf32> to vector<8x64xf32>
    %7 = arith.addf %4, %6 : vector<8x64xf32>
    %8 = arith.negf %7 : vector<8x64xf32>
    %9 = math.exp %8 : vector<8x64xf32>
    %cst_7 = arith.constant 1.000000e+00 : f32
    %10 = vector.broadcast %cst_7 : f32 to vector<8x64xf32>
    %11 = arith.addf %10, %9 : vector<8x64xf32>
    %12 = arith.divf %10, %11 : vector<8x64xf32>
    %13 = vector.extract_strided_slice %12 {offsets = [0, 0], sizes = [8, 32], strides = [1, 1]} : vector<8x64xf32> to vector<8x32xf32>
    %14 = vector.extract_strided_slice %12 {offsets = [0, 32], sizes = [8, 32], strides = [1, 1]} : vector<8x64xf32> to vector<8x32xf32>
    %15 = vector.extract_strided_slice %3 {offsets = [0, 64], sizes = [8, 32], strides = [1, 1]} : vector<8x128xf32> to vector<8x32xf32>
    %c0_8 = arith.constant 0 : index
    %c0_9 = arith.constant 0 : index
    %16 = vector.load %arg4[%c0_8, %c0_9] : memref<1x32xf32, #tpu.memory_space<vmem>>, vector<1x32xf32>
    %17 = vector.broadcast %16 : vector<1x32xf32> to vector<8x32xf32>
    %18 = arith.addf %15, %17 : vector<8x32xf32>
    %19 = vector.extract_strided_slice %3 {offsets = [0, 96], sizes = [8, 32], strides = [1, 1]} : vector<8x128xf32> to vector<8x32xf32>
    %c0_10 = arith.constant 0 : index
    %c0_11 = arith.constant 0 : index
    %20 = vector.load %arg5[%c0_10, %c0_11] : memref<1x32xf32, #tpu.memory_space<vmem>>, vector<1x32xf32>
    %21 = vector.broadcast %20 : vector<1x32xf32> to vector<8x32xf32>
    %22 = arith.addf %19, %21 : vector<8x32xf32>
    %23 = arith.mulf %13, %22 : vector<8x32xf32>
    %24 = arith.addf %18, %23 : vector<8x32xf32>
    %25 = math.tanh %24 : vector<8x32xf32>
    %cst_12 = arith.constant 1.000000e+00 : f32
    %26 = vector.broadcast %cst_12 : f32 to vector<8x32xf32>
    %27 = arith.subf %26, %14 : vector<8x32xf32>
    %28 = arith.mulf %27, %25 : vector<8x32xf32>
    %29 = arith.mulf %14, %0 : vector<8x32xf32>
    %30 = arith.addf %28, %29 : vector<8x32xf32>
    %c0_13 = arith.constant 0 : index
    %c0_14 = arith.constant 0 : index
    %31 = vector.load %arg6[%c0_13, %c0_14] : memref<32x16xf32, #tpu.memory_space<vmem>>, vector<32x16xf32>
    %cst_15 = arith.constant dense<0.000000e+00> : vector<8x16xf32>
    %32 = tpu.matmul %30, %31, %cst_15 {dimension_numbers = #tpu.dot_dimension_numbers<[1], [0], [0], [1], [0, 0, 1, 1], [], []>} : vector<8x32xf32>, vector<32x16xf32>, vector<8x16xf32> -> vector<8x16xf32>
    %c0_16 = arith.constant 0 : index
    %c0_17 = arith.constant 0 : index
    %33 = vector.load %arg7[%c0_16, %c0_17] : memref<1x16xf32, #tpu.memory_space<vmem>>, vector<1x16xf32>
    %34 = vector.broadcast %33 : vector<1x16xf32> to vector<8x16xf32>
    %35 = arith.addf %32, %34 : vector<8x16xf32>
    %cst_18 = arith.constant 0.000000e+00 : f32
    %36 = vector.broadcast %cst_18 : f32 to vector<8x16xf32>
    %37 = arith.maximumf %35, %36 : vector<8x16xf32>
    %c0_19 = arith.constant 0 : index
    %c0_20 = arith.constant 0 : index
    %38 = vector.load %arg8[%c0_19, %c0_20] : memref<8x16xf32, #tpu.memory_space<vmem>>, vector<8x16xf32>
    tpu.vector_store %arg8[%c0_19, %c0_20], %37 {strides = array<i32>} : memref<8x16xf32, #tpu.memory_space<vmem>>, vector<8x16xf32>,
    %c0_21 = arith.constant 0 : index
    %c0_22 = arith.constant 0 : index
    %39 = vector.load %arg9[%c0_21, %c0_22] : memref<8x32xf32, #tpu.memory_space<vmem>>, vector<8x32xf32>
    tpu.vector_store %arg9[%c0_21, %c0_22], %30 {strides = array<i32>} : memref<8x32xf32, #tpu.memory_space<vmem>>, vector<8x32xf32>,
    return
  }
}

</mosaic_0001>

<llo_original>
// kernel: prediction_encoder_forward.1
$region0: #{prediction_encoder_forward.1}
  #allocation0 [shape = 'u32[]', space=smem, size = 0x4, offset = 0x4, fixed_abs, tag = 'smem constant byte address 0x4 - core index']
  #allocation1 [shape = 'u32[144,128]{1,0:T(1,128)}', space=vmem, size = 0x12000, scoped, tag = 'internal scratch']
  %s0 = inlined_call_operand.vmem [shape: f32[8,64], index: 0, kind: input, shape index: {}]
  %s1 = inlined_call_operand.vmem [shape: f32[8,32], index: 1, kind: input, shape index: {}, may-alias: {1,9}]
  %s2 = inlined_call_operand.vmem [shape: f32[64,128], index: 2, kind: input, shape index: {}]
  %s3 = inlined_call_operand.vmem [shape: f32[1,64], index: 3, kind: input, shape index: {}]
  %s4 = inlined_call_operand.vmem [shape: f32[1,32], index: 4, kind: input, shape index: {}]
  %s5 = inlined_call_operand.vmem [shape: f32[1,32], index: 5, kind: input, shape index: {}]
  %s6 = inlined_call_operand.vmem [shape: f32[32,16], index: 6, kind: input, shape index: {}]
  %s7 = inlined_call_operand.vmem [shape: f32[1,16], index: 7, kind: input, shape index: {}]
  %s8 = inlined_call_operand.hbm [shape: f32[8,16], index: 8, kind: output, shape index: {0}]
  %s9 = inlined_call_operand.vmem [shape: f32[8,32], index: 9, kind: output, shape index: {1}, may-alias: {1,9}]
  %10 = xla_tuple %s8, %s9
  %s11 = sld [smem:[#allocation0]]
  $region50: #{prediction_encoder_forward.1} parent=0
    _
  %s13 = ssub.s32 1, %s11
  %s14 = scalar_select 0, %s13, %s11
  $region1: #{prediction_encoder_forward.1} parent=0
    #allocation2 [shape = 'u8[4096]{0}', space=vmem, size = 0x1000, scoped, tag = 'output window, operand 0, single buffered']
    #allocation3 [shape = 's32[1]{0}', space=sflag, size = 0x4, scoped, tag = 'scoped memory for prediction_encoder_forward.1']
    %15 = vsyncpa [#allocation3], 0
    // Predicated region
    $region2: #{prediction_encoder_forward.1} parent=1 // pred_check
      _
    $region3: #{prediction_encoder_forward.1} parent=1 // pred_check_branch
      %17 = sbr.rel (0) target = $region5
    $region4: #{prediction_encoder_forward.1} parent=1 // pred_region
      _
    $region5: #{prediction_encoder_forward.1} parent=1 // pred_fallthru
      _
    // Predicated region
    $region6: #{prediction_encoder_forward.1} parent=1 // pred_check
      _
    $region7: #{prediction_encoder_forward.1} parent=1 // pred_check_branch
      %19 = sbr.rel (0) target = $region9
    $region8: #{prediction_encoder_forward.1} parent=1 // pred_region
      _
    $region9: #{prediction_encoder_forward.1} parent=1 // pred_fallthru
      _
    // Predicated region
    $region10: #{prediction_encoder_forward.1} parent=1 // pred_check
      _
    $region11: #{prediction_encoder_forward.1} parent=1 // pred_check_branch
      %21 = sbr.rel (0) target = $region13
    $region12: #{prediction_encoder_forward.1} parent=1 // pred_region
      _
    $region13: #{prediction_encoder_forward.1} parent=1 // pred_fallthru
      _
    // Predicated region
    $region14: #{prediction_encoder_forward.1} parent=1 // pred_check
      _
    $region15: #{prediction_encoder_forward.1} parent=1 // pred_check_branch
      %23 = sbr.rel (0) target = $region17
    $region16: #{prediction_encoder_forward.1} parent=1 // pred_region
      _
    $region17: #{prediction_encoder_forward.1} parent=1 // pred_fallthru
      _
    // Predicated region
    $region18: #{prediction_encoder_forward.1} parent=1 // pred_check
      _
    $region19: #{prediction_encoder_forward.1} parent=1 // pred_check_branch
      %25 = sbr.rel (0) target = $region21
    $region20: #{prediction_encoder_forward.1} parent=1 // pred_region
      _
    $region21: #{prediction_encoder_forward.1} parent=1 // pred_fallthru
      _
    // Predicated region
    $region22: #{prediction_encoder_forward.1} parent=1 // pred_check
      _
    $region23: #{prediction_encoder_forward.1} parent=1 // pred_check_branch
      %27 = sbr.rel (0) target = $region25
    $region24: #{prediction_encoder_forward.1} parent=1 // pred_region
      _
    $region25: #{prediction_encoder_forward.1} parent=1 // pred_fallthru
      _
    // Predicated region
    $region26: #{prediction_encoder_forward.1} parent=1 // pred_check
      _
    $region27: #{prediction_encoder_forward.1} parent=1 // pred_check_branch
      %29 = sbr.rel (0) target = $region29
    $region28: #{prediction_encoder_forward.1} parent=1 // pred_region
      _
    $region29: #{prediction_encoder_forward.1} parent=1 // pred_fallthru
      _
    // Predicated region
    $region30: #{prediction_encoder_forward.1} parent=1 // pred_check
      _
    $region31: #{prediction_encoder_forward.1} parent=1 // pred_check_branch
      %31 = sbr.rel (0) target = $region33
    $region32: #{prediction_encoder_forward.1} parent=1 // pred_region
      _
    $region33: #{prediction_encoder_forward.1} parent=1 // pred_fallthru
      _
    %v32 = vld [vmem:[%s1] sm:$0xff]
    %v33 = vld [vmem:[%s0] sm:$0xff]
    %v34 = vld [vmem:[%s2] sm:$0xff]
    %v35 = vld [vmem:[%s2 + $0x8] sm:$0xff]
    %v36 = vld [vmem:[%s2 + $0x10] sm:$0xff]
    %v37 = vld [vmem:[%s2 + $0x18] sm:$0xff]
    %v38 = vld [vmem:[%s2 + $0x20] sm:$0xff]
    %v39 = vld [vmem:[%s2 + $0x28] sm:$0xff]
    %v40 = vld [vmem:[%s2 + $0x30] sm:$0xff]
    %v41 = vld [vmem:[%s2 + $0x38] sm:$0xff]
    %vm42 = vcmask 523264
    %v44 = vsel %vm42, %v33, 0
    %46 = vmatprep.subr.mxu0 0.0
    %47 = vmatpush1.msra.mxu0 0.0
    %48 = vmatprep.subr.mxu0 0.0
    %49 = vmatpush1.msra.mxu0 0.0
    %50 = vmatprep.subr.mxu0 0.0
    %51 = vmatpush1.msra.mxu0 0.0
    %52 = vmatprep.subr.mxu0 0.0
    %53 = vmatpush1.msra.mxu0 0.0
    %54 = vmatprep.subr.mxu0 0.0
    %55 = vmatpush1.msra.mxu0 0.0
    %56 = vmatprep.subr.mxu0 0.0
    %57 = vmatpush1.msra.mxu0 0.0
    %58 = vmatprep.subr.mxu0 0.0
    %59 = vmatpush1.msra.mxu0 0.0
    %60 = vmatprep.subr.mxu0 0.0
    %61 = vmatpush1.msra.mxu0 0.0
    %62 = vmatprep.subr.mxu0 0.0
    %63 = vmatpush1.msra.mxu0 %v41
    %64 = vmatprep.subr.mxu0 0.0
    %65 = vmatpush1.msra.mxu0 %v40
    %66 = vmatprep.subr.mxu0 0.0
    %67 = vmatpush1.msra.mxu0 %v39
    %68 = vmatprep.subr.mxu0 0.0
    %69 = vmatpush1.msra.mxu0 %v38
    %70 = vmatprep.subr.mxu0 0.0
    %71 = vmatpush1.msra.mxu0 %v37
    %72 = vmatprep.subr.mxu0 0.0
    %73 = vmatpush1.msra.mxu0 %v36
    %74 = vmatprep.subr.mxu0 0.0
    %75 = vmatpush1.msra.mxu0 %v35
    %76 = vmatprep.subr.mxu0 0.0
    %77 = vmatpush1.msra.mxu0 %v34
    %78 = vmatprep.subr.mxu0 0.0
    %79 = vmatpush2.msra.mxu0 0.0
    %80 = vmatprep.subr.mxu0 0.0
    %81 = vmatpush2.msra.mxu0 0.0
    %82 = vmatprep.subr.mxu0 0.0
    %83 = vmatpush2.msra.mxu0 0.0
    %84 = vmatprep.subr.mxu0 0.0
    %85 = vmatpush2.msra.mxu0 0.0
    %86 = vmatprep.subr.mxu0 0.0
    %87 = vmatpush2.msra.mxu0 0.0
    %88 = vmatprep.subr.mxu0 0.0
    %89 = vmatpush2.msra.mxu0 0.0
    %90 = vmatprep.subr.mxu0 0.0
    %91 = vmatpush2.msra.mxu0 0.0
    %92 = vmatprep.subr.mxu0 0.0
    %93 = vmatpush2.msra.mxu0 0.0
    %94 = vmatprep.subr.mxu0 0.0
    %95 = vmatpush2.msra.mxu0 0.0
    %96 = vmatprep.subr.mxu0 0.0
    %97 = vmatpush2.msra.mxu0 0.0
    %98 = vmatprep.subr.mxu0 0.0
    %99 = vmatpush2.msra.mxu0 0.0
    %100 = vmatprep.subr.mxu0 0.0
    %101 = vmatpush2.msra.mxu0 0.0
    %102 = vmatprep.subr.mxu0 0.0
    %103 = vmatpush2.msra.mxu0 0.0
    %104 = vmatprep.subr.mxu0 0.0
    %105 = vmatpush2.msra.mxu0 0.0
    %106 = vmatprep.subr.mxu0 0.0
    %107 = vmatpush2.msra.mxu0 0.0
    %108 = vmatprep.subr.mxu0 0.0
    %109 = vmatpush2.msra.mxu0 0.0
    %110 = vmatprep.mubr.f32.mxu0 0.0
    %111 = vmatmul.mubr.f32.gmra.mxu0 %v44
    %v112 = vpop.f32.mrf.mxu0
    %v113 = vadd.f32 0.0, %v112
    %v114 = vpop.f32.mrf.mxu0
    %115 = vdwg.mxu0
    %v116 = vld [vmem:[%s3] sm:$0x1]
    %v118 = vlaneseq
    %v119 = vshrl.u32 %v118, 7
    %v120 = vsub.s32 0, %v119
    %v121 = vrot.slane %v116, %v120
    %v123 = vadd.f32 %v113, %v121
    %v124 = vxor.u32 %v123, 2147483648
    %v125 = vmul.f32 %v124, 1.442695
    %v126 = vpow.pop %v125
    %v127 = vadd.f32 %v126, 1.0
    %v128 = vrcp.pop %v127
    %v129 = vmul.f32 1.0, %v128
    %v130 = vld [vmem:[%s4] sm:$0x1]
    %v132 = vlaneseq
    %v133 = vshrl.u32 %v132, 7
    %v134 = vsub.s32 0, %v133
    %v135 = vrot.slane %v130, %v134
    %136 = vrot.lane.b32.xlu0 %v135, 64
    %v137 = vpop.permute.xlu0 %136
    %v139 = vadd.f32 %v113, %v137
    %v140 = vld [vmem:[%s5] sm:$0x1]
    %v142 = vlaneseq
    %v143 = vshrl.u32 %v142, 7
    %v144 = vsub.s32 0, %v143
    %v145 = vrot.slane %v140, %v144
    %146 = vrot.lane.b32.xlu0 %v145, 96
    %v147 = vpop.permute.xlu0 %146
    %v149 = vadd.f32 %v113, %v147
    %151 = vrot.lane.b32.xlu0 %v149, 32
    %v152 = vpop.permute.xlu0 %151
    %v154 = vmul.f32 %v129, %v152
    %156 = vrot.lane.b32.xlu0 %v154, 64
    %v157 = vpop.permute.xlu0 %156
    %v159 = vadd.f32 %v139, %v157
    %v160 = vtanh.pop %v159
    %v161 = vsub.f32 1.0, %v129
    %163 = vrot.lane.b32.xlu0 %v160, 96
    %v164 = vpop.permute.xlu0 %163
    %v166 = vmul.f32 %v161, %v164
    %168 = vrot.lane.b32.xlu0 %v32, 32
    %v169 = vpop.permute.xlu0 %168
    %v171 = vmul.f32 %v129, %v169
    %v172 = vadd.f32 %v166, %v171
    %v173 = vld [vmem:[%s6] sm:$0xff]
    %v174 = vld [vmem:[%s6 + $0x8] sm:$0xff]
    %v175 = vld [vmem:[%s6 + $0x10] sm:$0xff]
    %v176 = vld [vmem:[%s6 + $0x18] sm:$0xff]
    %v177 = vld [vmem:[%s7] sm:$0x1]
    %v179 = vlaneseq
    %v180 = vshrl.u32 %v179, 7
    %v181 = vsub.s32 0, %v180
    %v182 = vrot.slane %v177, %v181
    %185 = vrot.lane.b32.xlu0 %v172, 96
    %v186 = vpop.permute.xlu0 %185
    %vm187 = vcmask 261120
    %v188 = vsel %vm187, %v186, 0
    %190 = vmatprep.subr.mxu0 0.0
    %191 = vmatpush1.msra.mxu0 0.0
    %192 = vmatprep.subr.mxu0 0.0
    %193 = vmatpush1.msra.mxu0 0.0
    %194 = vmatprep.subr.mxu0 0.0
    %195 = vmatpush1.msra.mxu0 0.0
    %196 = vmatprep.subr.mxu0 0.0
    %197 = vmatpush1.msra.mxu0 0.0
    %198 = vmatprep.subr.mxu0 0.0
    %199 = vmatpush1.msra.mxu0 0.0
    %200 = vmatprep.subr.mxu0 0.0
    %201 = vmatpush1.msra.mxu0 0.0
    %202 = vmatprep.subr.mxu0 0.0
    %203 = vmatpush1.msra.mxu0 0.0
    %204 = vmatprep.subr.mxu0 0.0
    %205 = vmatpush1.msra.mxu0 0.0
    %206 = vmatprep.subr.mxu0 0.0
    %207 = vmatpush1.msra.mxu0 0.0
    %208 = vmatprep.subr.mxu0 0.0
    %209 = vmatpush1.msra.mxu0 0.0
    %210 = vmatprep.subr.mxu0 0.0
    %211 = vmatpush1.msra.mxu0 0.0
    %212 = vmatprep.subr.mxu0 0.0
    %213 = vmatpush1.msra.mxu0 0.0
    %214 = vmatprep.subr.mxu0 0.0
    %215 = vmatpush1.msra.mxu0 %v176
    %216 = vmatprep.subr.mxu0 0.0
    %217 = vmatpush1.msra.mxu0 %v175
    %218 = vmatprep.subr.mxu0 0.0
    %219 = vmatpush1.msra.mxu0 %v174
    %220 = vmatprep.subr.mxu0 0.0
    %221 = vmatpush1.msra.mxu0 %v173
    %222 = vmatprep.subr.mxu0 0.0
    %223 = vmatpush2.msra.mxu0 0.0
    %224 = vmatprep.subr.mxu0 0.0
    %225 = vmatpush2.msra.mxu0 0.0
    %226 = vmatprep.subr.mxu0 0.0
    %227 = vmatpush2.msra.mxu0 0.0
    %228 = vmatprep.subr.mxu0 0.0
    %229 = vmatpush2.msra.mxu0 0.0
    %230 = vmatprep.subr.mxu0 0.0
    %231 = vmatpush2.msra.mxu0 0.0
    %232 = vmatprep.subr.mxu0 0.0
    %233 = vmatpush2.msra.mxu0 0.0
    %234 = vmatprep.subr.mxu0 0.0
    %235 = vmatpush2.msra.mxu0 0.0
    %236 = vmatprep.subr.mxu0 0.0
    %237 = vmatpush2.msra.mxu0 0.0
    %238 = vmatprep.subr.mxu0 0.0
    %239 = vmatpush2.msra.mxu0 0.0
    %240 = vmatprep.subr.mxu0 0.0
    %241 = vmatpush2.msra.mxu0 0.0
    %242 = vmatprep.subr.mxu0 0.0
    %243 = vmatpush2.msra.mxu0 0.0
    %244 = vmatprep.subr.mxu0 0.0
    %245 = vmatpush2.msra.mxu0 0.0
    %246 = vmatprep.subr.mxu0 0.0
    %247 = vmatpush2.msra.mxu0 0.0
    %248 = vmatprep.subr.mxu0 0.0
    %249 = vmatpush2.msra.mxu0 0.0
    %250 = vmatprep.subr.mxu0 0.0
    %251 = vmatpush2.msra.mxu0 0.0
    %252 = vmatprep.subr.mxu0 0.0
    %253 = vmatpush2.msra.mxu0 0.0
    %254 = vmatprep.mubr.f32.mxu0 0.0
    %255 = vmatmul.mubr.f32.gmra.mxu0 %v188
    %v256 = vpop.f32.mrf.mxu0
    %v257 = vadd.f32 %v182, %v256
    %v258 = vpop.f32.mrf.mxu0
    %259 = vdwg.mxu0
    %v260 = vmax.f32 %v257, 0.0
    %vm261 = vcmask 130048
    %262 = vst.msk [vmem:[#allocation2] sm:$0xff] %vm261, %v260
    %264 = vst.msk [vmem:[%s9] sm:$0xff] %vm187, %v186
    // Predicated region
    $region34: #{prediction_encoder_forward.1} parent=1 // pred_check
      _
    $region35: #{prediction_encoder_forward.1} parent=1 // pred_check_branch
      %266 = sbr.rel (0) target = $region37
    $region36: #{prediction_encoder_forward.1} parent=1 // pred_region
      %s268 = ssub.s32 128, 128
      %269 = vsyncadd [#allocation3], %s268
      %s271 = sshll.u32 [#allocation2], 4
      %s272 = int_to_ptr.vmem [resolvable:$true] %s271
      %274 = dma.vmem_to_hbm [thread:$0]  %s272, 128, %s8, [#allocation3]
    $region37: #{prediction_encoder_forward.1} parent=1 // pred_fallthru
      _
    // Predicated region
    $region38: #{prediction_encoder_forward.1} parent=1 // pred_check
      _
    $region39: #{prediction_encoder_forward.1} parent=1 // pred_check_branch
      %276 = sbr.rel (0) target = $region41
    $region40: #{prediction_encoder_forward.1} parent=1 // pred_region
      _
    $region41: #{prediction_encoder_forward.1} parent=1 // pred_fallthru
      _
    // Predicated region
    $region42: #{prediction_encoder_forward.1} parent=1 // pred_check
      _
    $region43: #{prediction_encoder_forward.1} parent=1 // pred_check_branch
      %278 = sbr.rel (0) target = $region45
    $region44: #{prediction_encoder_forward.1} parent=1 // pred_region
      %279 = dma.done [#allocation3], 128
    $region45: #{prediction_encoder_forward.1} parent=1 // pred_fallthru
      _
    // Predicated region
    $region46: #{prediction_encoder_forward.1} parent=1 // pred_check
      _
    $region47: #{prediction_encoder_forward.1} parent=1 // pred_check_branch
      %281 = sbr.rel (0) target = $region49
    $region48: #{prediction_encoder_forward.1} parent=1 // pred_region
      _
    $region49: #{prediction_encoder_forward.1} parent=1 // pred_fallthru
      _
    %282 = vsyncpa [#allocation3], 1

</llo_original>
